<compile_context>
chip_gen: v5e
topology: v5e:2x2
jax: 0.10.0
libtpu: 0.0.40
codegen_flags: <defaults>
</compile_context>

<pallas_src>
import functools

import jax
import jax.numpy as jnp
from jax.experimental import pallas as pl
from jax.experimental.pallas import tpu as pltpu


def _round_up(x, m):
    return ((x + m - 1) // m) * m


def _cdiv(a, b):
    return (a + b - 1) // b


def _tpu_generation_info():
    """Best-effort (physical VMEM bytes, TensorCores per chip) detection."""
    vmem_phys = 64 * 1024 * 1024   # conservative default (v7x per-TC VMEM)
    num_tc = 1
    kind = ""
    try:
        kind = jax.devices()[0].device_kind.lower()
    except Exception:
        pass
    if ("v5" in kind) or ("v6" in kind):
        vmem_phys = 128 * 1024 * 1024
    if "v7" in kind:
        num_tc = 2
    try:  # refine with the Pallas hardware query when available
        info = pltpu.get_tpu_info()
        vmem_phys = int(getattr(info, "vmem_capacity_bytes", vmem_phys))
    except Exception:
        pass
    return vmem_phys, num_tc


def _span_coherent_kernel(x_ref, w_ref, b_ref, o_ref, *, a_dim, b_dim):
    two_a = 2 * a_dim
    # One fused MXU matmul producing only the needed columns, pre-ordered as
    # [a1 | a2 | a3 | a4]; f32 accumulation, f32 bias add and coherent math.
    lr = jnp.dot(x_ref[...], w_ref[...],
                 preferred_element_type=jnp.float32) + b_ref[...]
    # Two stores total: contiguous [a1 | a2], then the single reduction column.
    o_ref[:, :two_a] = lr[:, :two_a].astype(o_ref.dtype)
    a3 = lr[:, two_a:two_a + b_dim]
    a4 = lr[:, two_a + b_dim:]
    o_ref[:, two_a:] = jnp.sum(a3 * a4, axis=-1,
                               keepdims=True).astype(o_ref.dtype)


def span_encoder_coherent(inputs, span, wl, bl, wr, br, *, a_dim, b_dim,
                          tile_rows=None, compute_dtype=jnp.bfloat16,
                          out_dtype=jnp.float32):
    """Pallas implementation of SpanEncoder.forward (encoding='coherent', x_mlp=True).

    inputs: (B, T, H) float32
    span:   (B, M, 2) int32
    wl, wr: (d_dim, H) float32   (PyTorch nn.Linear weight layout)
    bl, br: (d_dim,)   float32
    returns (B, M, 2*a_dim + 1) out_dtype
    """
    B, T, H = inputs.shape
    M = span.shape[1]
    d_dim = 2 * (a_dim + b_dim)
    out_dim = 2 * a_dim + 1
    N = B * M

    in_isz = jnp.dtype(compute_dtype).itemsize
    out_isz = jnp.dtype(out_dtype).itemsize

    # ---- per-generation VMEM budget ------------------------------------------------
    vmem_phys, num_tc = _tpu_generation_info()
    if vmem_phys >= 128 * 1024 * 1024:        # v5e / v6e
        vmem_cap = 100 * 1024 * 1024
    else:                                     # v7x (64 MiB per TC) / unknown
        vmem_cap = 48 * 1024 * 1024

    # VMEM per row: double-buffered input tile + double-buffered output tile +
    # the f32 matmul intermediate `lr` (tile_m, d_dim).  Weights are resident.
    row_in_bytes = 2 * H * in_isz
    per_row_vmem = 2 * row_in_bytes + 2 * out_dim * out_isz + d_dim * 4
    w_bytes = 2 * (2 * H * d_dim * in_isz + d_dim * 4)

    # ---- tile size: target >= ~2 MiB of x_cat per grid step, clamp by VMEM ---------
    if tile_rows is None:
        tile_m = max(512, _cdiv(2 * 1024 * 1024, row_in_bytes))
    else:
        tile_m = int(tile_rows)
    vmem_budget = int(0.7 * vmem_cap) - w_bytes    # headroom for relayout temporaries
    tile_m = min(tile_m, max(16, vmem_budget // per_row_vmem))
    tile_m = min(tile_m, _round_up(N, 16))         # no point bigger than the problem
    if num_tc > 1 and N > num_tc * 16:             # v7x: keep both TensorCores busy
        tile_m = min(tile_m, _round_up(_cdiv(N, num_tc), 16))
    tile_m = max(16, _round_up(tile_m, 16))        # bf16 sublane-packing friendly
    grid_m = _cdiv(N, tile_m)
    n_pad = grid_m * tile_m

    # ---- glue: endpoint gather (XLA) on compute_dtype.  The ragged pad is applied to
    # the tiny (N, 2) int32 index array (padded rows point at row 0, a valid index),
    # so x_cat is produced already padded -- no full-tensor jnp.pad copy.
    # TODO(synk): for large H (>= ~256) an in-kernel gather (scalar-prefetched
    # flat_idx + per-row pltpu.make_async_copy from an ANY-space inputs ref) would
    # avoid materializing x_cat entirely; at small H the per-row DMA-descriptor
    # overhead outweighs the saved bytes, so the XLA gather path is kept.
    inputs_flat = inputs.reshape(B * T, H).astype(compute_dtype)
    flat_idx = (jnp.arange(B, dtype=span.dtype)[:, None, None] * T
                + span).reshape(N, 2)
    if n_pad != N:
        flat_idx = jnp.pad(flat_idx, ((0, n_pad - N), (0, 0)))
    x_cat = inputs_flat[flat_idx].reshape(n_pad, 2 * H)          # (n_pad, 2H)

    # ---- fused weights: only the needed output columns, ordered [a1|a2|a3|a4] ------
    wl_t = wl.T.astype(compute_dtype)        # (H, d_dim)
    wr_t = wr.T.astype(compute_dtype)
    w_fused = jnp.zeros((2 * H, d_dim), dtype=compute_dtype)
    w_fused = w_fused.at[:H, :a_dim].set(wl_t[:, :a_dim])                       # a1 <- l
    w_fused = w_fused.at[H:, a_dim:2 * a_dim].set(wr_t[:, a_dim:2 * a_dim])     # a2 <- r
    w_fused = w_fused.at[:H, 2 * a_dim:2 * a_dim + b_dim].set(
        wl_t[:, 2 * a_dim:2 * a_dim + b_dim])                                   # a3 <- l
    w_fused = w_fused.at[H:, 2 * a_dim + b_dim:].set(wr_t[:, d_dim - b_dim:])   # a4 <- r
    b_fused = jnp.concatenate(
        [bl[:a_dim], br[a_dim:2 * a_dim],
         bl[2 * a_dim:2 * a_dim + b_dim], br[d_dim - b_dim:]]
    ).reshape(1, d_dim).astype(jnp.float32)

    # ---- vmem_limit: actual need (tiles + f32 intermediate + weights) x2 slack -----
    needed = tile_m * per_row_vmem + w_bytes
    vmem_limit = int(min(vmem_cap, max(32 * 1024 * 1024, 2 * needed)))

    kernel = functools.partial(_span_coherent_kernel, a_dim=a_dim, b_dim=b_dim)

    out = pl.pallas_call(
        kernel,
        out_shape=jax.ShapeDtypeStruct((n_pad, out_dim), out_dtype),
        grid_spec=pltpu.PrefetchScalarGridSpec(
            num_scalar_prefetch=0,
            grid=(grid_m,),
            in_specs=[
                pl.BlockSpec((tile_m, 2 * H), lambda i: (i, 0)),    # x_cat row tile
                pl.BlockSpec((2 * H, d_dim), lambda i: (0, 0)),     # fused weights
                pl.BlockSpec((1, d_dim), lambda i: (0, 0)),         # fused bias
            ],
            out_specs=pl.BlockSpec((tile_m, out_dim), lambda i: (i, 0)),
        ),
        compiler_params=pltpu.CompilerParams(
            dimension_semantics=("parallel",),
            vmem_limit_bytes=vmem_limit,
        ),
    )(x_cat, w_fused, b_fused)

    return out[:N].reshape(B, M, out_dim)


def _reference(inputs, span, wl, bl, wr, br, a_dim, b_dim,
               matmul_dtype=jnp.float32):
    """Pure-JAX reference mirroring the PyTorch forward (optionally bf16 matmuls)."""
    B = inputs.shape[0]
    d_dim = 2 * (a_dim + b_dim)
    bidx = jnp.arange(B)[:, None]
    xl = inputs[bidx, span[..., 0]]
    xr = inputs[bidx, span[..., 1]]
    l = jnp.dot(xl.astype(matmul_dtype), wl.T.astype(matmul_dtype),
                preferred_element_type=jnp.float32) + bl
    r = jnp.dot(xr.astype(matmul_dtype), wr.T.astype(matmul_dtype),
                preferred_element_type=jnp.float32) + br
    a1 = l[..., :a_dim]
    a2 = r[..., a_dim:2 * a_dim]
    a3 = l[..., 2 * a_dim:d_dim - b_dim]
    a4 = r[..., d_dim - b_dim:]
    a34 = jnp.einsum('bmh,bmh->bm', a3, a4)[..., None]
    return jnp.concatenate([a1, a2, a34], axis=-1)


if __name__ == "__main__":
    # Small deterministic shapes consistent with the module.
    B, T, H = 2, 16, 32          # batch, seq_len, hidden_dim
    M = 10                       # spans per example (N=20 -> exercises row padding)
    a_dim, b_dim = 8, 8          # conf.a_dim, conf.b_dim
    d_dim = 2 * (a_dim + b_dim)  # = 32

    key = jax.random.PRNGKey(0)
    k_in, k_s0, k_s1, k_wl, k_bl, k_wr, k_br = jax.random.split(key, 7)

    inputs = jax.random.normal(k_in, (B, T, H), dtype=jnp.float32)
    s0 = jax.random.randint(k_s0, (B, M), 0, T, dtype=jnp.int32)
    s1 = jax.random.randint(k_s1, (B, M), 0, T, dtype=jnp.int32)
    span = jnp.stack([s0, s1], axis=-1)                       # (B, M, 2)

    # Deterministic Linear params (nn.Linear default-style uniform init).
    bound = 1.0 / float(H) ** 0.5
    wl = jax.random.uniform(k_wl, (d_dim, H), minval=-bound, maxval=bound,
                            dtype=jnp.float32)
    bl = jax.random.uniform(k_bl, (d_dim,), minval=-bound, maxval=bound,
                            dtype=jnp.float32)
    wr = jax.random.uniform(k_wr, (d_dim, H), minval=-bound, maxval=bound,
                            dtype=jnp.float32)
    br = jax.random.uniform(k_br, (d_dim,), minval=-bound, maxval=bound,
                            dtype=jnp.float32)

    # Default path: auto (byte-targeted) tile size, bf16 compute.
    out = span_encoder_coherent(inputs, span, wl, bl, wr, br,
                                a_dim=a_dim, b_dim=b_dim)
    out = jax.block_until_ready(out)
    assert out.shape == (B, M, 2 * a_dim + 1)

    # Multi-tile + ragged path: tile_rows=16 -> 2 grid steps with padded last block.
    out_small = span_encoder_coherent(inputs, span, wl, bl, wr, br,
                                      a_dim=a_dim, b_dim=b_dim, tile_rows=16)
    out_small = jax.block_until_ready(out_small)

    # Full-f32 compute path (exercises the tiling/rounding logic without bf16 cast).
    out_f32c = span_encoder_coherent(inputs, span, wl, bl, wr, br,
                                     a_dim=a_dim, b_dim=b_dim,
                                     compute_dtype=jnp.float32)
    out_f32c = jax.block_until_ready(out_f32c)

    ref_bf16 = _reference(inputs, span, wl, bl, wr, br, a_dim, b_dim,
                          matmul_dtype=jnp.bfloat16)
    ref_f32 = _reference(inputs, span, wl, bl, wr, br, a_dim, b_dim,
                         matmul_dtype=jnp.float32)

    assert jnp.allclose(out, ref_bf16, atol=2e-3, rtol=2e-3), \
        "mismatch vs bf16-matmul reference"
    assert jnp.allclose(out, ref_f32, atol=1e-1, rtol=1e-1), \
        "mismatch vs f32 reference"
    assert jnp.allclose(out_small, out, atol=2e-3, rtol=2e-3), \
        "result depends on tile size"
    assert jnp.allclose(out_f32c, ref_f32, atol=1e-2, rtol=1e-2), \
        "f32-compute path mismatch vs f32 reference"

    # TODO(synk): 'endpoint' encoding path (allennlp EndpointSpanExtractor /
    # SelfAttentiveSpanExtractor) not implemented; kernel covers the 'coherent'
    # encoding with x_mlp=True ('concat' is a trivial subset: a = [l | r]).
    print("KERNEL_OK")
</pallas_src>

<mosaic_0001>
module attributes {stable_mosaic.version = 11 : i64} {
  func.func @_span_coherent_kernel(%arg0: i32, %arg1: memref<32x64xbf16, #tpu.memory_space<vmem>>, %arg2: memref<64x32xbf16, #tpu.memory_space<vmem>>, %arg3: memref<1x32xf32, #tpu.memory_space<vmem>>, %arg4: memref<32x17xf32, #tpu.memory_space<vmem>>) attributes {dimension_semantics = [#tpu.dimension_semantics<parallel>], iteration_bounds = array<i64: 1>, scalar_prefetch = 0 : i64, scratch_operands = 0 : i64, tpu.core_type = #tpu.core_type<tc>, window_params = [{transform_indices = @transform_0, window_bounds = array<i64: 32, 64>}, {pipeline_mode = #tpu.pipeline_mode<synchronous>, transform_indices = @transform_1, window_bounds = array<i64: 64, 32>}, {pipeline_mode = #tpu.pipeline_mode<synchronous>, transform_indices = @transform_2, window_bounds = array<i64: 1, 32>}, {transform_indices = @transform_3, window_bounds = array<i64: 32, 17>}]} {
    %c0 = arith.constant 0 : index
    %c0_0 = arith.constant 0 : index
    %0 = vector.load %arg1[%c0, %c0_0] : memref<32x64xbf16, #tpu.memory_space<vmem>>, vector<32x64xbf16>
    %c0_1 = arith.constant 0 : index
    %c0_2 = arith.constant 0 : index
    %1 = vector.load %arg2[%c0_1, %c0_2] : memref<64x32xbf16, #tpu.memory_space<vmem>>, vector<64x32xbf16>
    %cst = arith.constant dense<0.000000e+00> : vector<32x32xf32>
    %2 = tpu.matmul %0, %1, %cst {dimension_numbers = #tpu.dot_dimension_numbers<[1], [0], [0], [1], [0, 0, 1, 1], [], []>} : vector<32x64xbf16>, vector<64x32xbf16>, vector<32x32xf32> -> vector<32x32xf32>
    %c0_3 = arith.constant 0 : index
    %c0_4 = arith.constant 0 : index
    %3 = vector.load %arg3[%c0_3, %c0_4] : memref<1x32xf32, #tpu.memory_space<vmem>>, vector<1x32xf32>
    %4 = vector.broadcast %3 : vector<1x32xf32> to vector<32x32xf32>
    %5 = arith.addf %2, %4 : vector<32x32xf32>
    %6 = vector.extract_strided_slice %5 {offsets = [0, 0], sizes = [32, 16], strides = [1, 1]} : vector<32x32xf32> to vector<32x16xf32>
    %c0_5 = arith.constant 0 : index
    %c0_6 = arith.constant 0 : index
    %7 = vector.load %arg4[%c0_5, %c0_6] : memref<32x17xf32, #tpu.memory_space<vmem>>, vector<32x16xf32>
    tpu.vector_store %arg4[%c0_5, %c0_6], %6 {strides = array<i32>} : memref<32x17xf32, #tpu.memory_space<vmem>>, vector<32x16xf32>,
    %8 = vector.extract_strided_slice %5 {offsets = [0, 16], sizes = [32, 8], strides = [1, 1]} : vector<32x32xf32> to vector<32x8xf32>
    %9 = vector.extract_strided_slice %5 {offsets = [0, 24], sizes = [32, 8], strides = [1, 1]} : vector<32x32xf32> to vector<32x8xf32>
    %10 = arith.mulf %8, %9 : vector<32x8xf32>
    %cst_7 = arith.constant dense<0.000000e+00> : vector<32xf32>
    %11 = vector.multi_reduction <add>, %10, %cst_7 [1] : vector<32x8xf32> to vector<32xf32>
    %12 = vector.shape_cast %11 : vector<32xf32> to vector<32x1xf32>
    %c0_8 = arith.constant 0 : index
    %c16 = arith.constant 16 : index
    %13 = vector.load %arg4[%c0_8, %c16] : memref<32x17xf32, #tpu.memory_space<vmem>>, vector<32x1xf32>
    tpu.vector_store %arg4[%c0_8, %c16], %12 {strides = array<i32>} : memref<32x17xf32, #tpu.memory_space<vmem>>, vector<32x1xf32>,
    return
  }
  func.func @transform_0(%arg0: i32) -> (i32, i32) {
    %c0_i32 = arith.constant 0 : i32
    %c0_i32_0 = arith.constant 0 : i32
    return %arg0, %c0_i32 : i32, i32
  }
  func.func @transform_1(%arg0: i32) -> (i32, i32) {
    %c0_i32 = arith.constant 0 : i32
    %c0_i32_0 = arith.constant 0 : i32
    %c0_i32_1 = arith.constant 0 : i32
    return %c0_i32, %c0_i32_0 : i32, i32
  }
  func.func @transform_2(%arg0: i32) -> (i32, i32) {
    %c0_i32 = arith.constant 0 : i32
    %c0_i32_0 = arith.constant 0 : i32
    %c0_i32_1 = arith.constant 0 : i32
    return %c0_i32, %c0_i32_0 : i32, i32
  }
  func.func @transform_3(%arg0: i32) -> (i32, i32) {
    %c0_i32 = arith.constant 0 : i32
    %c0_i32_0 = arith.constant 0 : i32
    return %arg0, %c0_i32 : i32, i32
  }
}

</mosaic_0001>

<llo_original>
// kernel: tpu_custom_call.1
$region0: #{tpu_custom_call.1}
  #allocation0 [shape = 'u32[]', space=smem, size = 0x4, offset = 0x4, fixed_abs, tag = 'smem constant byte address 0x4 - core index']
  #allocation1 [shape = 'u32[72,128]{1,0:T(1,128)}', space=vmem, size = 0x9000, scoped, tag = 'internal scratch']
  %s0 = inlined_call_operand.vmem [shape: bf16[32,64], index: 0, kind: input, shape index: {}]
  %s1 = inlined_call_operand.vmem [shape: bf16[64,32], index: 1, kind: input, shape index: {}]
  %s2 = inlined_call_operand.vmem [shape: f32[1,32], index: 2, kind: input, shape index: {}]
  %s3 = inlined_call_operand.vmem [shape: f32[32,17], index: 3, kind: output, shape index: {}]
  %s4 = sld [smem:[#allocation0]]
  $region22: #{tpu_custom_call.1} parent=0
    _
  %s6 = ssub.s32 1, %s4
  %s7 = scalar_select 0, %s6, %s4
  // Predicated region
  $region2: #{tpu_custom_call.1} parent=0 // pred_check
    _
  $region3: #{tpu_custom_call.1} parent=0 // pred_check_branch
    %9 = sbr.rel (0) target = $region5
  $region4: #{tpu_custom_call.1} parent=0 // pred_region
    _
  $region5: #{tpu_custom_call.1} parent=0 // pred_fallthru
    _
  // Predicated region
  $region6: #{tpu_custom_call.1} parent=0 // pred_check
    _
  $region7: #{tpu_custom_call.1} parent=0 // pred_check_branch
    %11 = sbr.rel (0) target = $region9
  $region8: #{tpu_custom_call.1} parent=0 // pred_region
    _
  $region9: #{tpu_custom_call.1} parent=0 // pred_fallthru
    _
  // Predicated region
  $region10: #{tpu_custom_call.1} parent=0 // pred_check
    _
  $region11: #{tpu_custom_call.1} parent=0 // pred_check_branch
    %13 = sbr.rel (0) target = $region13
  $region12: #{tpu_custom_call.1} parent=0 // pred_region
    _
  $region13: #{tpu_custom_call.1} parent=0 // pred_fallthru
    _
  %v15 = vld [vmem:[%s0] sm:$0xf]
  %v16 = vld [vmem:[%s0 + $0x4] sm:$0xf]
  %v17 = vld [vmem:[%s0 + $0x8] sm:$0xf]
  %v18 = vld [vmem:[%s0 + $0xc] sm:$0xf]
  %v19 = vld [vmem:[%s1] sm:$0xf]
  %v20 = vld [vmem:[%s1 + $0x4] sm:$0xf]
  %v21 = vld [vmem:[%s1 + $0x8] sm:$0xf]
  %v22 = vld [vmem:[%s1 + $0xc] sm:$0xf]
  %v23 = vld [vmem:[%s1 + $0x10] sm:$0xf]
  %v24 = vld [vmem:[%s1 + $0x14] sm:$0xf]
  %v25 = vld [vmem:[%s1 + $0x18] sm:$0xf]
  %v26 = vld [vmem:[%s1 + $0x1c] sm:$0xf]
  %v27 = vld [vmem:[%s2] sm:$0x1]
  %v29 = vperm.slane %v27, 0
  %v35 = vunpack.c.l.b16 %v15
  %v36 = vunpack.c.l.b16 %v16
  %v37 = vunpack.c.l.b16 %v17
  %v38 = vunpack.c.l.b16 %v18
  %v39 = vpack.c.b16 %v36, %v35
  %v40 = vpack.c.b16 %v38, %v37
  %v49 = vunpack.c.l.b16 %v19
  %v50 = vunpack.c.l.b16 %v20
  %v51 = vunpack.c.l.b16 %v21
  %v52 = vunpack.c.l.b16 %v22
  %v53 = vunpack.c.l.b16 %v23
  %v54 = vunpack.c.l.b16 %v24
  %v55 = vunpack.c.l.b16 %v25
  %v56 = vunpack.c.l.b16 %v26
  %v57 = vpack.c.b16 %v50, %v49
  %v58 = vpack.c.b16 %v52, %v51
  %v59 = vpack.c.b16 %v54, %v53
  %v60 = vpack.c.b16 %v56, %v55
  %vm65 = vcmask 523264
  %v67 = vsel %vm65, %v39, 0
  %v70 = vsel %vm65, %v40, 0
  %72 = vmatpush.bf16.msra.mxu0 0
  %73 = vmatpush.bf16.msra.mxu0 0
  %74 = vmatpush.bf16.msra.mxu0 0
  %75 = vmatpush.bf16.msra.mxu0 0
  %76 = vmatpush.bf16.msra.mxu0 %v60
  %77 = vmatpush.bf16.msra.mxu0 %v59
  %78 = vmatpush.bf16.msra.mxu0 %v58
  %79 = vmatpush.bf16.msra.mxu0 %v57
  %80 = vmatmul.bf16.gmra.mxu0 %v67
  %v81 = vpop.f32.mrf.mxu0
  %v82 = vadd.f32 %v29, %v81
  %v83 = vpop.f32.mrf.mxu0
  %v84 = vadd.f32 %v29, %v83
  %85 = vmatmul.bf16.gmra.mxu0 %v70
  %v86 = vpop.f32.mrf.mxu0
  %v87 = vadd.f32 %v29, %v86
  %v88 = vpop.f32.mrf.mxu0
  %v89 = vadd.f32 %v29, %v88
  %90 = vdwg.mxu0
  %vm91 = vcmask 130048
  %92 = vst.msk [vmem:[%s3] sm:$0xff] %vm91, %v82
  %93 = vst.msk [vmem:[%s3 + $0x8] sm:$0xff] %vm91, %v84
  %94 = vst.msk [vmem:[%s3 + $0x10] sm:$0xff] %vm91, %v87
  %95 = vst.msk [vmem:[%s3 + $0x18] sm:$0xff] %vm91, %v89
  %100 = vrot.lane.b32.xlu0 %v82, 120
  %v101 = vpop.permute.xlu0 %100
  %102 = vrot.lane.b32.xlu0 %v84, 120
  %v103 = vpop.permute.xlu0 %102
  %104 = vrot.lane.b32.xlu0 %v87, 120
  %v105 = vpop.permute.xlu0 %104
  %106 = vrot.lane.b32.xlu0 %v89, 120
  %v107 = vpop.permute.xlu0 %106
  %v112 = vmul.f32 %v82, %v101
  %v113 = vmul.f32 %v84, %v103
  %v114 = vmul.f32 %v87, %v105
  %v115 = vmul.f32 %v89, %v107
  %120 = vrot.lane.b32.xlu0 %v112, 112
  %v121 = vpop.permute.xlu0 %120
  %122 = vrot.lane.b32.xlu0 %v113, 112
  %v123 = vpop.permute.xlu0 %122
  %124 = vrot.lane.b32.xlu0 %v114, 112
  %v125 = vpop.permute.xlu0 %124
  %126 = vrot.lane.b32.xlu0 %v115, 112
  %v127 = vpop.permute.xlu0 %126
  %vm132 = vcmask 64512
  %v133 = vsel %vm132, %v121, 0.0
  %134 = vadd.xlane.f32.xlu0 %v133
  %v135 = vpop.xlane.xlu0 %134
  %v136 = vsel %vm132, %v123, 0.0
  %137 = vadd.xlane.f32.xlu0 %v136
  %v138 = vpop.xlane.xlu0 %137
  %v139 = vsel %vm132, %v125, 0.0
  %140 = vadd.xlane.f32.xlu0 %v139
  %v141 = vpop.xlane.xlu0 %140
  %v142 = vsel %vm132, %v127, 0.0
  %143 = vadd.xlane.f32.xlu0 %v142
  %v144 = vpop.xlane.xlu0 %143
  %vm145 = vcmask 138368
  %146 = vst.msk [vmem:[%s3] sm:$0xff] %vm145, %v135
  %147 = vst.msk [vmem:[%s3 + $0x8] sm:$0xff] %vm145, %v138
  %148 = vst.msk [vmem:[%s3 + $0x10] sm:$0xff] %vm145, %v141
  %149 = vst.msk [vmem:[%s3 + $0x18] sm:$0xff] %vm145, %v144
  // Predicated region
  $region14: #{tpu_custom_call.1} parent=0 // pred_check
    _
  $region15: #{tpu_custom_call.1} parent=0 // pred_check_branch
    %151 = sbr.rel (0) target = $region17
  $region16: #{tpu_custom_call.1} parent=0 // pred_region
    _
  $region17: #{tpu_custom_call.1} parent=0 // pred_fallthru
    _
  // Predicated region
  $region18: #{tpu_custom_call.1} parent=0 // pred_check
    _
  $region19: #{tpu_custom_call.1} parent=0 // pred_check_branch
    %153 = sbr.rel (0) target = $region21
  $region20: #{tpu_custom_call.1} parent=0 // pred_region
    _
  $region21: #{tpu_custom_call.1} parent=0 // pred_fallthru
    _

</llo_original>
